<compile_context>
chip_gen: v6e
topology: v6e:2x2x1
jax: 0.10.0
libtpu: 0.0.40
codegen_flags: <defaults>
</compile_context>

<pallas_src>
import functools

import jax
import jax.numpy as jnp
from jax import lax
from jax.experimental import pallas as pl
from jax.experimental.pallas import tpu as pltpu


def _round_up(x, m):
    return ((x + m - 1) // m) * m


def _actor_fused_kernel(n_layers, unroll,
                        x_ref, w_in_ref, b_in_ref,
                        w_hid_ref, b_hid_ref,
                        w_out_ref, b_out_ref,
                        out_ref):
    # Fused input projection (both branches at once): (Bb, n_inp) @ (n_inp, 2H).
    h = jnp.dot(x_ref[...], w_in_ref[...], preferred_element_type=jnp.float32)
    h = jnp.maximum(h + b_in_ref[...].astype(jnp.float32), 0.0)

    # Hidden stack: block-diagonal (2H, 2H) weight per layer keeps the two
    # branches independent while sharing one MXU pass per layer.
    def body(ii, h):
        w = w_hid_ref[ii]                              # (2H, 2H), compute dtype
        z = jnp.dot(h.astype(w.dtype), w, preferred_element_type=jnp.float32)
        return jnp.maximum(z + b_hid_ref[ii].astype(jnp.float32), 0.0)

    h = lax.fori_loop(0, n_layers, body, h, unroll=unroll)

    # Fused, lane-dense output head: (Bb, 2H) @ (2H, n_out_pad).
    w_out = w_out_ref[...]
    z = jnp.dot(h.astype(w_out.dtype), w_out, preferred_element_type=jnp.float32)
    out_ref[...] = (z + b_out_ref[...].astype(jnp.float32)).astype(out_ref.dtype)


def fuse_actor_params(p, n_layers, n_actions, n_out_pad,
                      compute_dtype=jnp.bfloat16):
    """Build block-diagonal fused weights from per-branch f32 params."""
    n_inp, n_hid = p["w_i2a"].shape
    two_h = 2 * n_hid
    f32 = jnp.float32

    w_in = jnp.concatenate([p["w_i2a"], p["w_i2v"]], axis=1)        # (n_inp, 2H)
    b_in = jnp.concatenate([p["b_i2a"], p["b_i2v"]], axis=1)        # (1, 2H)

    z = jnp.zeros((n_layers, n_hid, n_hid), f32)
    w_hid = jnp.concatenate(
        [jnp.concatenate([p["w_act"], z], axis=2),
         jnp.concatenate([z, p["w_val"]], axis=2)], axis=1)          # (L, 2H, 2H)
    b_hid = jnp.concatenate([p["b_act"], p["b_val"]], axis=2)        # (L, 1, 2H)

    w_out = jnp.zeros((two_h, n_out_pad), f32)
    w_out = w_out.at[:n_hid, :n_actions].set(p["w_a2o"])
    w_out = w_out.at[n_hid:, n_actions:n_actions + 1].set(p["w_v2o"])
    b_out = jnp.zeros((1, n_out_pad), f32)
    b_out = b_out.at[:, :n_actions].set(p["b_a2o"])
    b_out = b_out.at[:, n_actions:n_actions + 1].set(p["b_v2o"])

    cast = lambda a: a.astype(compute_dtype)
    return dict(w_in=cast(w_in), b_in=cast(b_in),
                w_hid=cast(w_hid), b_hid=cast(b_hid),
                w_out=cast(w_out), b_out=cast(b_out))


def actor_forward(x, params, n_layers, n_actions=5, *,
                  block_b=128, compute_dtype=jnp.bfloat16):
    """x: (B, n_inp) float32; params: per-branch dict in (in, out) layout."""
    B, n_inp = x.shape
    n_hid = params["w_i2a"].shape[1]
    two_h = 2 * n_hid
    n_out = n_actions + 1
    n_out_pad = _round_up(n_out, 128)            # lane-dense output slab

    fp = fuse_actor_params(params, n_layers, n_actions, n_out_pad, compute_dtype)

    # Batch tiling (grid) with zero padding up to a multiple of the tile.
    block_b = min(block_b, _round_up(B, 8))
    B_pad = _round_up(B, block_b)
    xc = x.astype(compute_dtype)
    if B_pad != B:
        xc = jnp.pad(xc, ((0, B_pad - B), (0, 0)))
    grid = (B_pad // block_b,)

    def fixed(shape):
        nd = len(shape)
        return pl.BlockSpec(shape, lambda i, _nd=nd: (0,) * _nd)

    in_specs = [
        pl.BlockSpec((block_b, n_inp), lambda i: (i, 0)),   # x: batch-tiled
        fixed(fp["w_in"].shape), fixed(fp["b_in"].shape),   # weights: resident
        fixed(fp["w_hid"].shape), fixed(fp["b_hid"].shape),
        fixed(fp["w_out"].shape), fixed(fp["b_out"].shape),
    ]
    out_specs = pl.BlockSpec((block_b, n_out_pad), lambda i: (i, 0))

    # VMEM budget / scheduler hints.
    itemsize = jnp.dtype(compute_dtype).itemsize
    weight_bytes = sum(int(a.size) * a.dtype.itemsize for a in fp.values())
    act_bytes = block_b * (n_inp * itemsize + two_h * 4 + n_out_pad * 4)
    vmem_limit = int(min(100 * 2**20,
                         max(16 * 2**20, 4 * (weight_bytes + act_bytes))))
    flops = 2 * B_pad * (n_inp * two_h + n_layers * two_h * two_h
                         + two_h * n_out_pad)
    bytes_accessed = int(xc.size * itemsize + weight_bytes
                         + B_pad * n_out_pad * 4)

    out = pl.pallas_call(
        functools.partial(_actor_fused_kernel, n_layers, n_layers <= 8),
        grid=grid,
        in_specs=in_specs,
        out_specs=out_specs,
        out_shape=jax.ShapeDtypeStruct((B_pad, n_out_pad), jnp.float32),
        compiler_params=pltpu.CompilerParams(
            dimension_semantics=("parallel",),   # v7x: shard batch over 2 TCs
            vmem_limit_bytes=vmem_limit),
        cost_estimate=pl.CostEstimate(
            flops=flops, transcendentals=0, bytes_accessed=bytes_accessed),
    )(xc, fp["w_in"], fp["b_in"], fp["w_hid"], fp["b_hid"],
      fp["w_out"], fp["b_out"])

    act_out = out[:B, :n_actions]
    val_out = out[:B, n_actions:n_actions + 1]
    return act_out, val_out


def init_actor_params(key, n_inp, n_hid, n_layers, n_actions=5):
    """Deterministic init mirroring nn.Linear's U(-1/sqrt(fan_in), 1/sqrt(fan_in)).
    act2out / val2out biases are zero-filled, as in the PyTorch __init__."""
    ks = jax.random.split(key, 10)

    def lin(k, fan_in, fan_out):
        kw, kb = jax.random.split(k)
        bound = 1.0 / jnp.sqrt(fan_in)
        w = jax.random.uniform(kw, (fan_in, fan_out), jnp.float32, -bound, bound)
        b = jax.random.uniform(kb, (1, fan_out), jnp.float32, -bound, bound)
        return w, b

    w_i2a, b_i2a = lin(ks[0], n_inp, n_hid)
    w_i2v, b_i2v = lin(ks[1], n_inp, n_hid)

    def stack(k):
        ws, bs = [], []
        for kk in jax.random.split(k, n_layers):
            w, b = lin(kk, n_hid, n_hid)
            ws.append(w)
            bs.append(b)
        return jnp.stack(ws), jnp.stack(bs)   # (L, n_hid, n_hid), (L, 1, n_hid)

    w_act, b_act = stack(ks[2])
    w_val, b_val = stack(ks[3])

    w_a2o, _ = lin(ks[4], n_hid, n_actions)
    b_a2o = jnp.zeros((1, n_actions), jnp.float32)   # bias.data.fill_(0)
    w_v2o, _ = lin(ks[5], n_hid, 1)
    b_v2o = jnp.zeros((1, 1), jnp.float32)           # bias.data.fill_(0)

    return dict(
        w_i2a=w_i2a, b_i2a=b_i2a, w_i2v=w_i2v, b_i2v=b_i2v,
        w_act=w_act, b_act=b_act, w_val=w_val, b_val=b_val,
        w_a2o=w_a2o, b_a2o=b_a2o, w_v2o=w_v2o, b_v2o=b_v2o,
    )


def actor_reference(x, p, n_layers):
    """Pure-JAX f32 reference for correctness checking."""
    act = jax.nn.relu(x @ p["w_i2a"] + p["b_i2a"])
    val = jax.nn.relu(x @ p["w_i2v"] + p["b_i2v"])
    for ii in range(n_layers):
        act = jax.nn.relu(act @ p["w_act"][ii] + p["b_act"][ii])
        val = jax.nn.relu(val @ p["w_val"][ii] + p["b_val"][ii])
    return act @ p["w_a2o"] + p["b_a2o"], val @ p["w_v2o"] + p["b_v2o"]


if __name__ == "__main__":
    B, n_inp, n_hid, n_layers, n_actions = 8, 32, 32, 2, 5

    key = jax.random.PRNGKey(0)
    k_x, k_p = jax.random.split(key)
    x = jax.random.normal(k_x, (B, n_inp), jnp.float32)
    params = init_actor_params(k_p, n_inp, n_hid, n_layers, n_actions)

    act_out, val_out = actor_forward(x, params, n_layers, n_actions)
    jax.block_until_ready((act_out, val_out))

    ref_act, ref_val = actor_reference(x, params, n_layers)
    assert act_out.shape == (B, n_actions) and val_out.shape == (B, 1)
    # bf16 weights/activations with f32 accumulation -> loosened tolerance.
    assert jnp.allclose(act_out, ref_act, atol=5e-2, rtol=5e-2)
    assert jnp.allclose(val_out, ref_val, atol=5e-2, rtol=5e-2)

    print("KERNEL_OK")
</pallas_src>

<mosaic_0001>
module attributes {stable_mosaic.version = 11 : i64} {
  func.func @_actor_fused_kernel(%arg0: i32, %arg1: memref<8x32xbf16, #tpu.memory_space<vmem>>, %arg2: memref<32x64xbf16, #tpu.memory_space<vmem>>, %arg3: memref<1x64xbf16, #tpu.memory_space<vmem>>, %arg4: memref<2x64x64xbf16, #tpu.memory_space<vmem>>, %arg5: memref<2x1x64xbf16, #tpu.memory_space<vmem>>, %arg6: memref<64x128xbf16, #tpu.memory_space<vmem>>, %arg7: memref<1x128xbf16, #tpu.memory_space<vmem>>, %arg8: memref<8x128xf32, #tpu.memory_space<vmem>>) attributes {dimension_semantics = [#tpu.dimension_semantics<parallel>], iteration_bounds = array<i64: 1>, scalar_prefetch = 0 : i64, scratch_operands = 0 : i64, tpu.core_type = #tpu.core_type<tc>, window_params = [{transform_indices = @transform_0, window_bounds = array<i64: 8, 32>}, {pipeline_mode = #tpu.pipeline_mode<synchronous>, transform_indices = @transform_1, window_bounds = array<i64: 32, 64>}, {pipeline_mode = #tpu.pipeline_mode<synchronous>, transform_indices = @transform_2, window_bounds = array<i64: 1, 64>}, {pipeline_mode = #tpu.pipeline_mode<synchronous>, transform_indices = @transform_3, window_bounds = array<i64: 2, 64, 64>}, {pipeline_mode = #tpu.pipeline_mode<synchronous>, transform_indices = @transform_4, window_bounds = array<i64: 2, 1, 64>}, {pipeline_mode = #tpu.pipeline_mode<synchronous>, transform_indices = @transform_5, window_bounds = array<i64: 64, 128>}, {pipeline_mode = #tpu.pipeline_mode<synchronous>, transform_indices = @transform_6, window_bounds = array<i64: 1, 128>}, {transform_indices = @transform_7, window_bounds = array<i64: 8, 128>}]} {
    %c0 = arith.constant 0 : index
    %c0_0 = arith.constant 0 : index
    %0 = vector.load %arg1[%c0, %c0_0] : memref<8x32xbf16, #tpu.memory_space<vmem>>, vector<8x32xbf16>
    %c0_1 = arith.constant 0 : index
    %c0_2 = arith.constant 0 : index
    %1 = vector.load %arg2[%c0_1, %c0_2] : memref<32x64xbf16, #tpu.memory_space<vmem>>, vector<32x64xbf16>
    %cst = arith.constant dense<0.000000e+00> : vector<8x64xf32>
    %2 = tpu.matmul %0, %1, %cst {dimension_numbers = #tpu.dot_dimension_numbers<[1], [0], [0], [1], [0, 0, 1, 1], [], []>} : vector<8x32xbf16>, vector<32x64xbf16>, vector<8x64xf32> -> vector<8x64xf32>
    %c0_3 = arith.constant 0 : index
    %c0_4 = arith.constant 0 : index
    %3 = vector.load %arg3[%c0_3, %c0_4] : memref<1x64xbf16, #tpu.memory_space<vmem>>, vector<1x64xbf16>
    %4 = arith.extf %3 : vector<1x64xbf16> to vector<1x64xf32>
    %5 = vector.broadcast %4 : vector<1x64xf32> to vector<8x64xf32>
    %6 = arith.addf %2, %5 : vector<8x64xf32>
    %cst_5 = arith.constant 0.000000e+00 : f32
    %7 = vector.broadcast %cst_5 : f32 to vector<8x64xf32>
    %8 = arith.maximumf %6, %7 : vector<8x64xf32>
    %c0_i32 = arith.constant 0 : i32
    %9 = arith.index_cast %c0_i32 : i32 to index
    %c0_6 = arith.constant 0 : index
    %c0_7 = arith.constant 0 : index
    %10 = vector.load %arg4[%9, %c0_6, %c0_7] : memref<2x64x64xbf16, #tpu.memory_space<vmem>>, vector<1x64x64xbf16>
    %11 = vector.shape_cast %10 : vector<1x64x64xbf16> to vector<64x64xbf16>
    %12 = arith.truncf %8 : vector<8x64xf32> to vector<8x64xbf16>
    %cst_8 = arith.constant dense<0.000000e+00> : vector<8x64xf32>
    %13 = tpu.matmul %12, %11, %cst_8 {dimension_numbers = #tpu.dot_dimension_numbers<[1], [0], [0], [1], [0, 0, 1, 1], [], []>} : vector<8x64xbf16>, vector<64x64xbf16>, vector<8x64xf32> -> vector<8x64xf32>
    %14 = arith.index_cast %c0_i32 : i32 to index
    %c0_9 = arith.constant 0 : index
    %c0_10 = arith.constant 0 : index
    %15 = vector.load %arg5[%14, %c0_9, %c0_10] : memref<2x1x64xbf16, #tpu.memory_space<vmem>>, vector<1x1x64xbf16>
    %16 = vector.shape_cast %15 : vector<1x1x64xbf16> to vector<1x64xbf16>
    %17 = arith.extf %16 : vector<1x64xbf16> to vector<1x64xf32>
    %18 = vector.broadcast %17 : vector<1x64xf32> to vector<8x64xf32>
    %19 = arith.addf %13, %18 : vector<8x64xf32>
    %cst_11 = arith.constant 0.000000e+00 : f32
    %20 = vector.broadcast %cst_11 : f32 to vector<8x64xf32>
    %21 = arith.maximumf %19, %20 : vector<8x64xf32>
    %c1_i32 = arith.constant 1 : i32
    %22 = arith.index_cast %c1_i32 : i32 to index
    %c0_12 = arith.constant 0 : index
    %c0_13 = arith.constant 0 : index
    %23 = vector.load %arg4[%22, %c0_12, %c0_13] : memref<2x64x64xbf16, #tpu.memory_space<vmem>>, vector<1x64x64xbf16>
    %24 = vector.shape_cast %23 : vector<1x64x64xbf16> to vector<64x64xbf16>
    %25 = arith.truncf %21 : vector<8x64xf32> to vector<8x64xbf16>
    %cst_14 = arith.constant dense<0.000000e+00> : vector<8x64xf32>
    %26 = tpu.matmul %25, %24, %cst_14 {dimension_numbers = #tpu.dot_dimension_numbers<[1], [0], [0], [1], [0, 0, 1, 1], [], []>} : vector<8x64xbf16>, vector<64x64xbf16>, vector<8x64xf32> -> vector<8x64xf32>
    %27 = arith.index_cast %c1_i32 : i32 to index
    %c0_15 = arith.constant 0 : index
    %c0_16 = arith.constant 0 : index
    %28 = vector.load %arg5[%27, %c0_15, %c0_16] : memref<2x1x64xbf16, #tpu.memory_space<vmem>>, vector<1x1x64xbf16>
    %29 = vector.shape_cast %28 : vector<1x1x64xbf16> to vector<1x64xbf16>
    %30 = arith.extf %29 : vector<1x64xbf16> to vector<1x64xf32>
    %31 = vector.broadcast %30 : vector<1x64xf32> to vector<8x64xf32>
    %32 = arith.addf %26, %31 : vector<8x64xf32>
    %cst_17 = arith.constant 0.000000e+00 : f32
    %33 = vector.broadcast %cst_17 : f32 to vector<8x64xf32>
    %34 = arith.maximumf %32, %33 : vector<8x64xf32>
    %c2_i32 = arith.constant 2 : i32
    %c0_18 = arith.constant 0 : index
    %c0_19 = arith.constant 0 : index
    %35 = vector.load %arg6[%c0_18, %c0_19] : memref<64x128xbf16, #tpu.memory_space<vmem>>, vector<64x128xbf16>
    %36 = arith.truncf %34 : vector<8x64xf32> to vector<8x64xbf16>
    %cst_20 = arith.constant dense<0.000000e+00> : vector<8x128xf32>
    %37 = tpu.matmul %36, %35, %cst_20 {dimension_numbers = #tpu.dot_dimension_numbers<[1], [0], [0], [1], [0, 0, 1, 1], [], []>} : vector<8x64xbf16>, vector<64x128xbf16>, vector<8x128xf32> -> vector<8x128xf32>
    %c0_21 = arith.constant 0 : index
    %c0_22 = arith.constant 0 : index
    %38 = vector.load %arg7[%c0_21, %c0_22] : memref<1x128xbf16, #tpu.memory_space<vmem>>, vector<1x128xbf16>
    %39 = arith.extf %38 : vector<1x128xbf16> to vector<1x128xf32>
    %40 = vector.broadcast %39 : vector<1x128xf32> to vector<8x128xf32>
    %41 = arith.addf %37, %40 : vector<8x128xf32>
    %c0_23 = arith.constant 0 : index
    %c0_24 = arith.constant 0 : index
    %42 = vector.load %arg8[%c0_23, %c0_24] : memref<8x128xf32, #tpu.memory_space<vmem>>, vector<8x128xf32>
    tpu.vector_store %arg8[%c0_23, %c0_24], %41 {strides = array<i32>} : memref<8x128xf32, #tpu.memory_space<vmem>>, vector<8x128xf32>,
    return
  }
  func.func @transform_0(%arg0: i32) -> (i32, i32) {
    %c0_i32 = arith.constant 0 : i32
    %c0_i32_0 = arith.constant 0 : i32
    return %arg0, %c0_i32 : i32, i32
  }
  func.func @transform_1(%arg0: i32) -> (i32, i32) {
    %c0_i32 = arith.constant 0 : i32
    %c0_i32_0 = arith.constant 0 : i32
    %c0_i32_1 = arith.constant 0 : i32
    return %c0_i32, %c0_i32_0 : i32, i32
  }
  func.func @transform_2(%arg0: i32) -> (i32, i32) {
    %c0_i32 = arith.constant 0 : i32
    %c0_i32_0 = arith.constant 0 : i32
    %c0_i32_1 = arith.constant 0 : i32
    return %c0_i32, %c0_i32_0 : i32, i32
  }
  func.func @transform_3(%arg0: i32) -> (i32, i32, i32) {
    %c0_i32 = arith.constant 0 : i32
    %c0_i32_0 = arith.constant 0 : i32
    %c0_i32_1 = arith.constant 0 : i32
    %c0_i32_2 = arith.constant 0 : i32
    return %c0_i32, %c0_i32_0, %c0_i32_1 : i32, i32, i32
  }
  func.func @transform_4(%arg0: i32) -> (i32, i32, i32) {
    %c0_i32 = arith.constant 0 : i32
    %c0_i32_0 = arith.constant 0 : i32
    %c0_i32_1 = arith.constant 0 : i32
    %c0_i32_2 = arith.constant 0 : i32
    return %c0_i32, %c0_i32_0, %c0_i32_1 : i32, i32, i32
  }
  func.func @transform_5(%arg0: i32) -> (i32, i32) {
    %c0_i32 = arith.constant 0 : i32
    %c0_i32_0 = arith.constant 0 : i32
    %c0_i32_1 = arith.constant 0 : i32
    return %c0_i32, %c0_i32_0 : i32, i32
  }
  func.func @transform_6(%arg0: i32) -> (i32, i32) {
    %c0_i32 = arith.constant 0 : i32
    %c0_i32_0 = arith.constant 0 : i32
    %c0_i32_1 = arith.constant 0 : i32
    return %c0_i32, %c0_i32_0 : i32, i32
  }
  func.func @transform_7(%arg0: i32) -> (i32, i32) {
    %c0_i32 = arith.constant 0 : i32
    %c0_i32_0 = arith.constant 0 : i32
    return %arg0, %c0_i32 : i32, i32
  }
}

</mosaic_0001>

<llo_original>
// kernel: tpu_custom_call.1
$region0: #{tpu_custom_call.1}
  #allocation0 [shape = 'u32[]', space=smem, size = 0x4, offset = 0x4, fixed_abs, tag = 'smem constant byte address 0x4 - core index']
  #allocation1 [shape = 'u32[144,128]{1,0:T(1,128)}', space=vmem, size = 0x12000, scoped, tag = 'internal scratch']
  %s0 = inlined_call_operand.hbm [shape: bf16[8,32], index: 0, kind: input, shape index: {}]
  %s1 = inlined_call_operand.hbm [shape: bf16[32,64], index: 1, kind: input, shape index: {}]
  %s2 = inlined_call_operand.vmem [shape: bf16[1,64], index: 2, kind: input, shape index: {}]
  %s3 = inlined_call_operand.hbm [shape: bf16[2,64,64], index: 3, kind: input, shape index: {}]
  %s4 = inlined_call_operand.vmem [shape: bf16[2,1,64], index: 4, kind: input, shape index: {}]
  %s5 = inlined_call_operand.hbm [shape: bf16[64,128], index: 5, kind: input, shape index: {}]
  %s6 = inlined_call_operand.vmem [shape: bf16[1,128], index: 6, kind: input, shape index: {}]
  %s7 = inlined_call_operand.hbm [shape: f32[8,128], index: 7, kind: output, shape index: {}]
  %s8 = sld [smem:[#allocation0]]
  $region54: #{tpu_custom_call.1} parent=0
    _
  %s10 = ssub.s32 1, %s8
  %s11 = scalar_select 0, %s10, %s8
  $region1: #{tpu_custom_call.1} parent=0
    #allocation2 [shape = 'u8[2048]{0}', space=vmem, size = 0x800, scoped, tag = 'input window, operand 0, single buffered']
    #allocation3 [shape = 's32[1]{0}', space=sflag, size = 0x4, scoped, tag = 'scoped memory for tpu_custom_call.1']
    #allocation4 [shape = 's32[1]{0}', space=sflag, size = 0x4, scoped, tag = 'scoped memory for tpu_custom_call.1']
    #allocation5 [shape = 'u8[8192]{0}', space=vmem, size = 0x2000, scoped, tag = 'input window, operand 1, single buffered']
    #allocation6 [shape = 's32[1]{0}', space=sflag, size = 0x4, scoped, tag = 'scoped memory for tpu_custom_call.1']
    #allocation7 [shape = 'u8[32768]{0}', space=vmem, size = 0x8000, scoped, tag = 'input window, operand 3, single buffered']
    #allocation8 [shape = 'u8[16384]{0}', space=vmem, size = 0x4000, scoped, tag = 'input window, operand 5, single buffered']
    #allocation9 [shape = 's32[1]{0}', space=sflag, size = 0x4, scoped, tag = 'scoped memory for tpu_custom_call.1']
    #allocation10 [shape = 'u8[4096]{0}', space=vmem, size = 0x1000, scoped, tag = 'output window, operand 0, single buffered']
    %12 = vsyncpa [#allocation3], 0
    %13 = vsyncpa [#allocation6], 0
    %14 = vsyncpa [#allocation9], 0
    %15 = vsyncpa [#allocation4], 0
    // Predicated region
    $region2: #{tpu_custom_call.1} parent=1 // pred_check
      _
    $region3: #{tpu_custom_call.1} parent=1 // pred_check_branch
      %17 = sbr.rel (0) target = $region5
    $region4: #{tpu_custom_call.1} parent=1 // pred_region
      %s19 = ssub.s32 64, 64
      %20 = vsyncadd [#allocation3], %s19
      %s22 = sshll.u32 [#allocation2], 4
      %s23 = int_to_ptr.vmem [resolvable:$true] %s22
      %25 = dma.hbm_to_vmem [thread:$0]  %s0, 64, %s23, [#allocation3]
    $region5: #{tpu_custom_call.1} parent=1 // pred_fallthru
      _
    // Predicated region
    $region6: #{tpu_custom_call.1} parent=1 // pred_check
      _
    $region7: #{tpu_custom_call.1} parent=1 // pred_check_branch
      %27 = sbr.rel (0) target = $region9
    $region8: #{tpu_custom_call.1} parent=1 // pred_region
      %s29 = ssub.s32 256, 256
      %30 = vsyncadd [#allocation6], %s29
      %s31 = sshll.u32 [#allocation5], 4
      %s32 = int_to_ptr.vmem [resolvable:$true] %s31
      %37 = dma.hbm_to_vmem [thread:$0]  %s1, 256, %s32, [#allocation6], 64, 64, 4
    $region9: #{tpu_custom_call.1} parent=1 // pred_fallthru
      _
    // Predicated region
    $region10: #{tpu_custom_call.1} parent=1 // pred_check
      _
    $region11: #{tpu_custom_call.1} parent=1 // pred_check_branch
      %39 = sbr.rel (0) target = $region13
    $region12: #{tpu_custom_call.1} parent=1 // pred_region
      _
    $region13: #{tpu_custom_call.1} parent=1 // pred_fallthru
      _
    // Predicated region
    $region14: #{tpu_custom_call.1} parent=1 // pred_check
      _
    $region15: #{tpu_custom_call.1} parent=1 // pred_check_branch
      %41 = sbr.rel (0) target = $region17
    $region16: #{tpu_custom_call.1} parent=1 // pred_region
      %s43 = ssub.s32 1024, 1024
      %44 = vsyncadd [#allocation6], %s43
      %s45 = sshll.u32 [#allocation7], 4
      %s46 = int_to_ptr.vmem [resolvable:$true] %s45
      %51 = dma.hbm_to_vmem [thread:$0]  %s3, 1024, %s46, [#allocation6], 64, 64, 4
    $region17: #{tpu_custom_call.1} parent=1 // pred_fallthru
      _
    // Predicated region
    $region18: #{tpu_custom_call.1} parent=1 // pred_check
      _
    $region19: #{tpu_custom_call.1} parent=1 // pred_check_branch
      %53 = sbr.rel (0) target = $region21
    $region20: #{tpu_custom_call.1} parent=1 // pred_region
      _
    $region21: #{tpu_custom_call.1} parent=1 // pred_fallthru
      _
    // Predicated region
    $region22: #{tpu_custom_call.1} parent=1 // pred_check
      _
    $region23: #{tpu_custom_call.1} parent=1 // pred_check_branch
      %55 = sbr.rel (0) target = $region25
    $region24: #{tpu_custom_call.1} parent=1 // pred_region
      %s57 = ssub.s32 512, 512
      %58 = vsyncadd [#allocation9], %s57
      %s59 = sshll.u32 [#allocation8], 4
      %s60 = int_to_ptr.vmem [resolvable:$true] %s59
      %65 = dma.hbm_to_vmem [thread:$0]  %s5, 512, %s60, [#allocation9], 64, 64, 4
    $region25: #{tpu_custom_call.1} parent=1 // pred_fallthru
      _
    // Predicated region
    $region26: #{tpu_custom_call.1} parent=1 // pred_check
      _
    $region27: #{tpu_custom_call.1} parent=1 // pred_check_branch
      %67 = sbr.rel (0) target = $region29
    $region28: #{tpu_custom_call.1} parent=1 // pred_region
      _
    $region29: #{tpu_custom_call.1} parent=1 // pred_fallthru
      _
    // Predicated region
    $region30: #{tpu_custom_call.1} parent=1 // pred_check
      _
    $region31: #{tpu_custom_call.1} parent=1 // pred_check_branch
      %69 = sbr.rel (0) target = $region33
    $region32: #{tpu_custom_call.1} parent=1 // pred_region
      %70 = dma.done [#allocation3], 64
    $region33: #{tpu_custom_call.1} parent=1 // pred_fallthru
      _
    // Predicated region
    $region34: #{tpu_custom_call.1} parent=1 // pred_check
      _
    $region35: #{tpu_custom_call.1} parent=1 // pred_check_branch
      %72 = sbr.rel (0) target = $region37
    $region36: #{tpu_custom_call.1} parent=1 // pred_region
      %73 = dma.done [#allocation6], 256
    $region37: #{tpu_custom_call.1} parent=1 // pred_fallthru
      _
    // Predicated region
    $region38: #{tpu_custom_call.1} parent=1 // pred_check
      _
    $region39: #{tpu_custom_call.1} parent=1 // pred_check_branch
      %75 = sbr.rel (0) target = $region41
    $region40: #{tpu_custom_call.1} parent=1 // pred_region
      %76 = dma.done [#allocation6], 1024
    $region41: #{tpu_custom_call.1} parent=1 // pred_fallthru
      _
    // Predicated region
    $region42: #{tpu_custom_call.1} parent=1 // pred_check
      _
    $region43: #{tpu_custom_call.1} parent=1 // pred_check_branch
      %78 = sbr.rel (0) target = $region45
    $region44: #{tpu_custom_call.1} parent=1 // pred_region
      %79 = dma.done [#allocation9], 512
    $region45: #{tpu_custom_call.1} parent=1 // pred_fallthru
      _
    %v81 = vld [vmem:[#allocation2] sm:$0xf]
    %v82 = vld [vmem:[#allocation5] sm:$0xf]
    %v83 = vld [vmem:[#allocation5 + $0x4] sm:$0xf]
    %v84 = vld [vmem:[#allocation5 + $0x8] sm:$0xf]
    %v85 = vld [vmem:[#allocation5 + $0xc] sm:$0xf]
    %v86 = vld [vmem:[%s2] sm:$0x1]
    %v87 = vunpack.c.l.bf16 %v86
    %v88 = vlaneseq
    %v89 = vshrl.u32 %v88, 7
    %v90 = vsub.s32 0, %v89
    %v91 = vrot.slane %v87, %v90
    %v96 = vunpack.c.l.b16 %v82
    %v97 = vunpack.c.l.b16 %v83
    %v98 = vunpack.c.l.b16 %v84
    %v99 = vunpack.c.l.b16 %v85
    %v100 = vpack.c.b16 %v97, %v96
    %v101 = vpack.c.b16 %v99, %v98
    %vm104 = vcmask 261120
    %v106 = vsel %vm104, %v81, 0
    %108 = vmatprep.subr.bf16.mxu0 0
    %109 = vmatpush1.bf16.msra.mxu0 0
    %110 = vmatprep.subr.bf16.mxu0 0
    %111 = vmatpush1.bf16.msra.mxu0 0
    %112 = vmatprep.subr.bf16.mxu0 0
    %113 = vmatpush1.bf16.msra.mxu0 0
    %114 = vmatprep.subr.bf16.mxu0 0
    %115 = vmatpush1.bf16.msra.mxu0 0
    %116 = vmatprep.subr.bf16.mxu0 0
    %117 = vmatpush1.bf16.msra.mxu0 0
    %118 = vmatprep.subr.bf16.mxu0 0
    %119 = vmatpush1.bf16.msra.mxu0 0
    %120 = vmatprep.subr.bf16.mxu0 0
    %121 = vmatpush1.bf16.msra.mxu0 %v101
    %122 = vmatprep.subr.bf16.mxu0 0
    %123 = vmatpush1.bf16.msra.mxu0 %v100
    %124 = vmatprep.subr.bf16.mxu0 0
    %125 = vmatpush2.bf16.msra.mxu0 0
    %126 = vmatprep.subr.bf16.mxu0 0
    %127 = vmatpush2.bf16.msra.mxu0 0
    %128 = vmatprep.subr.bf16.mxu0 0
    %129 = vmatpush2.bf16.msra.mxu0 0
    %130 = vmatprep.subr.bf16.mxu0 0
    %131 = vmatpush2.bf16.msra.mxu0 0
    %132 = vmatprep.subr.bf16.mxu0 0
    %133 = vmatpush2.bf16.msra.mxu0 0
    %134 = vmatprep.subr.bf16.mxu0 0
    %135 = vmatpush2.bf16.msra.mxu0 0
    %136 = vmatprep.subr.bf16.mxu0 0
    %137 = vmatpush2.bf16.msra.mxu0 0
    %138 = vmatprep.subr.bf16.mxu0 0
    %139 = vmatpush2.bf16.msra.mxu0 0
    %140 = vmatprep.mubr.bf16.mxu0 0
    %141 = vmatmul.mubr.bf16.gmra.mxu0 %v106
    %v142 = vpop.f32.mrf.mxu0
    %v143 = vadd.f32 %v91, %v142
    %v144 = vpop.f32.mrf.mxu0
    %v145 = vpop.f32.mrf.mxu0
    %v146 = vpop.f32.mrf.mxu0
    %147 = vdwg.mxu0
    %v148 = vmax.f32 %v143, 0.0
    %v149 = vld [vmem:[#allocation7] sm:$0xf]
    %v150 = vld [vmem:[#allocation7 + $0x4] sm:$0xf]
    %v151 = vld [vmem:[#allocation7 + $0x8] sm:$0xf]
    %v152 = vld [vmem:[#allocation7 + $0xc] sm:$0xf]
    %v153 = vld [vmem:[#allocation7 + $0x10] sm:$0xf]
    %v154 = vld [vmem:[#allocation7 + $0x14] sm:$0xf]
    %v155 = vld [vmem:[#allocation7 + $0x18] sm:$0xf]
    %v156 = vld [vmem:[#allocation7 + $0x1c] sm:$0xf]
    %v157 = vpack.c.bf16 %v148, %v148
    %v158 = vld [vmem:[%s4] sm:$0x1]
    %v159 = vunpack.c.l.bf16 %v158
    %v160 = vlaneseq
    %v161 = vshrl.u32 %v160, 7
    %v162 = vsub.s32 0, %v161
    %v163 = vrot.slane %v159, %v162
    %v172 = vunpack.c.l.b16 %v149
    %v173 = vunpack.c.l.b16 %v150
    %v174 = vunpack.c.l.b16 %v151
    %v175 = vunpack.c.l.b16 %v152
    %v176 = vunpack.c.l.b16 %v153
    %v177 = vunpack.c.l.b16 %v154
    %v178 = vunpack.c.l.b16 %v155
    %v179 = vunpack.c.l.b16 %v156
    %v180 = vpack.c.b16 %v173, %v172
    %v181 = vpack.c.b16 %v175, %v174
    %v182 = vpack.c.b16 %v177, %v176
    %v183 = vpack.c.b16 %v179, %v178
    %vm188 = vcmask 523264
    %v190 = vsel %vm188, %v157, 0
    %192 = vmatprep.subr.bf16.mxu0 0
    %193 = vmatpush1.bf16.msra.mxu0 0
    %194 = vmatprep.subr.bf16.mxu0 0
    %195 = vmatpush1.bf16.msra.mxu0 0
    %196 = vmatprep.subr.bf16.mxu0 0
    %197 = vmatpush1.bf16.msra.mxu0 0
    %198 = vmatprep.subr.bf16.mxu0 0
    %199 = vmatpush1.bf16.msra.mxu0 0
    %200 = vmatprep.subr.bf16.mxu0 0
    %201 = vmatpush1.bf16.msra.mxu0 %v183
    %202 = vmatprep.subr.bf16.mxu0 0
    %203 = vmatpush1.bf16.msra.mxu0 %v182
    %204 = vmatprep.subr.bf16.mxu0 0
    %205 = vmatpush1.bf16.msra.mxu0 %v181
    %206 = vmatprep.subr.bf16.mxu0 0
    %207 = vmatpush1.bf16.msra.mxu0 %v180
    %208 = vmatprep.subr.bf16.mxu0 0
    %209 = vmatpush2.bf16.msra.mxu0 0
    %210 = vmatprep.subr.bf16.mxu0 0
    %211 = vmatpush2.bf16.msra.mxu0 0
    %212 = vmatprep.subr.bf16.mxu0 0
    %213 = vmatpush2.bf16.msra.mxu0 0
    %214 = vmatprep.subr.bf16.mxu0 0
    %215 = vmatpush2.bf16.msra.mxu0 0
    %216 = vmatprep.subr.bf16.mxu0 0
    %217 = vmatpush2.bf16.msra.mxu0 0
    %218 = vmatprep.subr.bf16.mxu0 0
    %219 = vmatpush2.bf16.msra.mxu0 0
    %220 = vmatprep.subr.bf16.mxu0 0
    %221 = vmatpush2.bf16.msra.mxu0 0
    %222 = vmatprep.subr.bf16.mxu0 0
    %223 = vmatpush2.bf16.msra.mxu0 0
    %224 = vmatprep.mubr.bf16.mxu0 0
    %225 = vmatmul.mubr.bf16.gmra.mxu0 %v190
    %v226 = vpop.f32.mrf.mxu0
    %v227 = vadd.f32 %v163, %v226
    %v228 = vpop.f32.mrf.mxu0
    %v229 = vpop.f32.mrf.mxu0
    %v230 = vpop.f32.mrf.mxu0
    %231 = vdwg.mxu0
    %v232 = vmax.f32 %v227, 0.0
    %s233 = scalar_lea.vmem [#allocation7], 32
    %v234 = vld [vmem:[%s233] sm:$0xf]
    %v235 = vld [vmem:[%s233 + $0x4] sm:$0xf]
    %v236 = vld [vmem:[%s233 + $0x8] sm:$0xf]
    %v237 = vld [vmem:[%s233 + $0xc] sm:$0xf]
    %v238 = vld [vmem:[%s233 + $0x10] sm:$0xf]
    %v239 = vld [vmem:[%s233 + $0x14] sm:$0xf]
    %v240 = vld [vmem:[%s233 + $0x18] sm:$0xf]
    %v241 = vld [vmem:[%s233 + $0x1c] sm:$0xf]
    %v242 = vpack.c.bf16 %v232, %v232
    %s243 = scalar_lea.vmem %s4, 1
    %v244 = vld [vmem:[%s243] sm:$0x1]
    %v245 = vunpack.c.l.bf16 %v244
    %v246 = vlaneseq
    %v247 = vshrl.u32 %v246, 7
    %v248 = vsub.s32 0, %v247
    %v249 = vrot.slane %v245, %v248
    %v258 = vunpack.c.l.b16 %v234
    %v259 = vunpack.c.l.b16 %v235
    %v260 = vunpack.c.l.b16 %v236
    %v261 = vunpack.c.l.b16 %v237
    %v262 = vunpack.c.l.b16 %v238
    %v263 = vunpack.c.l.b16 %v239
    %v264 = vunpack.c.l.b16 %v240
    %v265 = vunpack.c.l.b16 %v241
    %v266 = vpack.c.b16 %v259, %v258
    %v267 = vpack.c.b16 %v261, %v260
    %v268 = vpack.c.b16 %v263, %v262
    %v269 = vpack.c.b16 %v265, %v264
    %v275 = vsel %vm188, %v242, 0
    %277 = vmatprep.subr.bf16.mxu0 0
    %278 = vmatpush1.bf16.msra.mxu0 0
    %279 = vmatprep.subr.bf16.mxu0 0
    %280 = vmatpush1.bf16.msra.mxu0 0
    %281 = vmatprep.subr.bf16.mxu0 0
    %282 = vmatpush1.bf16.msra.mxu0 0
    %283 = vmatprep.subr.bf16.mxu0 0
    %284 = vmatpush1.bf16.msra.mxu0 0
    %285 = vmatprep.subr.bf16.mxu0 0
    %286 = vmatpush1.bf16.msra.mxu0 %v269
    %287 = vmatprep.subr.bf16.mxu0 0
    %288 = vmatpush1.bf16.msra.mxu0 %v268
    %289 = vmatprep.subr.bf16.mxu0 0
    %290 = vmatpush1.bf16.msra.mxu0 %v267
    %291 = vmatprep.subr.bf16.mxu0 0
    %292 = vmatpush1.bf16.msra.mxu0 %v266
    %293 = vmatprep.subr.bf16.mxu0 0
    %294 = vmatpush2.bf16.msra.mxu0 0
    %295 = vmatprep.subr.bf16.mxu0 0
    %296 = vmatpush2.bf16.msra.mxu0 0
    %297 = vmatprep.subr.bf16.mxu0 0
    %298 = vmatpush2.bf16.msra.mxu0 0
    %299 = vmatprep.subr.bf16.mxu0 0
    %300 = vmatpush2.bf16.msra.mxu0 0
    %301 = vmatprep.subr.bf16.mxu0 0
    %302 = vmatpush2.bf16.msra.mxu0 0
    %303 = vmatprep.subr.bf16.mxu0 0
    %304 = vmatpush2.bf16.msra.mxu0 0
    %305 = vmatprep.subr.bf16.mxu0 0
    %306 = vmatpush2.bf16.msra.mxu0 0
    %307 = vmatprep.subr.bf16.mxu0 0
    %308 = vmatpush2.bf16.msra.mxu0 0
    %309 = vmatprep.mubr.bf16.mxu0 0
    %310 = vmatmul.mubr.bf16.gmra.mxu0 %v275
    %v311 = vpop.f32.mrf.mxu0
    %v312 = vadd.f32 %v249, %v311
    %v313 = vpop.f32.mrf.mxu0
    %v314 = vpop.f32.mrf.mxu0
    %v315 = vpop.f32.mrf.mxu0
    %316 = vdwg.mxu0
    %v317 = vmax.f32 %v312, 0.0
    %v318 = vld [vmem:[#allocation8] sm:$0xf]
    %v319 = vld [vmem:[#allocation8 + $0x4] sm:$0xf]
    %v320 = vld [vmem:[#allocation8 + $0x8] sm:$0xf]
    %v321 = vld [vmem:[#allocation8 + $0xc] sm:$0xf]
    %v322 = vld [vmem:[#allocation8 + $0x10] sm:$0xf]
    %v323 = vld [vmem:[#allocation8 + $0x14] sm:$0xf]
    %v324 = vld [vmem:[#allocation8 + $0x18] sm:$0xf]
    %v325 = vld [vmem:[#allocation8 + $0x1c] sm:$0xf]
    %v326 = vpack.c.bf16 %v317, %v317
    %v327 = vld [vmem:[%s6] sm:$0x1]
    %v328 = vunpack.c.l.bf16 %v327
    %v329 = vlaneseq
    %v330 = vshrl.u32 %v329, 7
    %v331 = vsub.s32 0, %v330
    %v332 = vrot.slane %v328, %v331
    %v341 = vunpack.c.l.b16 %v318
    %v342 = vunpack.c.l.b16 %v319
    %v343 = vunpack.c.l.b16 %v320
    %v344 = vunpack.c.l.b16 %v321
    %v345 = vunpack.c.l.b16 %v322
    %v346 = vunpack.c.l.b16 %v323
    %v347 = vunpack.c.l.b16 %v324
    %v348 = vunpack.c.l.b16 %v325
    %v349 = vpack.c.b16 %v342, %v341
    %v350 = vpack.c.b16 %v344, %v343
    %v351 = vpack.c.b16 %v346, %v345
    %v352 = vpack.c.b16 %v348, %v347
    %v358 = vsel %vm188, %v326, 0
    %360 = vmatprep.subr.bf16.mxu0 0
    %361 = vmatpush1.bf16.msra.mxu0 0
    %362 = vmatprep.subr.bf16.mxu0 0
    %363 = vmatpush1.bf16.msra.mxu0 0
    %364 = vmatprep.subr.bf16.mxu0 0
    %365 = vmatpush1.bf16.msra.mxu0 0
    %366 = vmatprep.subr.bf16.mxu0 0
    %367 = vmatpush1.bf16.msra.mxu0 0
    %368 = vmatprep.subr.bf16.mxu0 0
    %369 = vmatpush1.bf16.msra.mxu0 %v352
    %370 = vmatprep.subr.bf16.mxu0 0
    %371 = vmatpush1.bf16.msra.mxu0 %v351
    %372 = vmatprep.subr.bf16.mxu0 0
    %373 = vmatpush1.bf16.msra.mxu0 %v350
    %374 = vmatprep.subr.bf16.mxu0 0
    %375 = vmatpush1.bf16.msra.mxu0 %v349
    %376 = vmatprep.subr.bf16.mxu0 0
    %377 = vmatpush2.bf16.msra.mxu0 0
    %378 = vmatprep.subr.bf16.mxu0 0
    %379 = vmatpush2.bf16.msra.mxu0 0
    %380 = vmatprep.subr.bf16.mxu0 0
    %381 = vmatpush2.bf16.msra.mxu0 0
    %382 = vmatprep.subr.bf16.mxu0 0
    %383 = vmatpush2.bf16.msra.mxu0 0
    %384 = vmatprep.subr.bf16.mxu0 0
    %385 = vmatpush2.bf16.msra.mxu0 0
    %386 = vmatprep.subr.bf16.mxu0 0
    %387 = vmatpush2.bf16.msra.mxu0 0
    %388 = vmatprep.subr.bf16.mxu0 0
    %389 = vmatpush2.bf16.msra.mxu0 0
    %390 = vmatprep.subr.bf16.mxu0 0
    %391 = vmatpush2.bf16.msra.mxu0 0
    %392 = vmatprep.mubr.bf16.mxu0 0
    %393 = vmatmul.mubr.bf16.gmra.mxu0 %v358
    %v394 = vpop.f32.mrf.mxu0
    %v395 = vadd.f32 %v332, %v394
    %v396 = vpop.f32.mrf.mxu0
    %v397 = vpop.f32.mrf.mxu0
    %v398 = vpop.f32.mrf.mxu0
    %399 = vdwg.mxu0
    %400 = vst [vmem:[#allocation10] sm:$0xff] %v395
    // Predicated region
    $region46: #{tpu_custom_call.1} parent=1 // pred_check
      _
    $region47: #{tpu_custom_call.1} parent=1 // pred_check_branch
      %402 = sbr.rel (0) target = $region49
    $region48: #{tpu_custom_call.1} parent=1 // pred_region
      %s404 = ssub.s32 128, 128
      %405 = vsyncadd [#allocation4], %s404
      %s407 = sshll.u32 [#allocation10], 4
      %s408 = int_to_ptr.vmem [resolvable:$true] %s407
      %410 = dma.vmem_to_hbm [thread:$0]  %s408, 128, %s7, [#allocation4]
    $region49: #{tpu_custom_call.1} parent=1 // pred_fallthru
      _
    // Predicated region
    $region50: #{tpu_custom_call.1} parent=1 // pred_check
      _
    $region51: #{tpu_custom_call.1} parent=1 // pred_check_branch
      %412 = sbr.rel (0) target = $region53
    $region52: #{tpu_custom_call.1} parent=1 // pred_region
      %413 = dma.done [#allocation4], 128
    $region53: #{tpu_custom_call.1} parent=1 // pred_fallthru
      _
    %414 = vsyncpa [#allocation3], 1
    %415 = vsyncpa [#allocation6], 1
    %416 = vsyncpa [#allocation9], 1
    %417 = vsyncpa [#allocation4], 1

</llo_original>
